<compile_context>
chip_gen: v7x
topology: tpu7x:2x2x1
jax: 0.10.0
libtpu: 0.0.40
codegen_flags: <defaults>
</compile_context>

<pallas_src>
import jax
import jax.numpy as jnp
from jax.experimental import pallas as pl
from jax.experimental.pallas import tpu as pltpu


def _round_up(x, m):
    return (x + m - 1) // m * m


# ----------------------------------------------------------------------------
# Kernel: fused Linear -> ReLU -> Linear for a stack of heads.
# grid = (head, row_tile, vocab_tile); vocab is innermost ("arbitrary") so the
# h scratch computed at vocab_tile == 0 is reused across all vocab tiles.
# ----------------------------------------------------------------------------
def _fused_heads_kernel(x_ref, w1_ref, b1_ref, w2_ref, b2_ref, o_ref, h_ref):
    j = pl.program_id(2)  # vocab-tile index (innermost grid axis)

    @pl.when(j == 0)
    def _():
        # First matmul + bias + ReLU once per (head, row tile); f32 epilogue,
        # stored in the compute dtype so the W2 matmul reads it directly.
        h = jnp.dot(x_ref[...], w1_ref[...], preferred_element_type=jnp.float32)
        h_ref[...] = jnp.maximum(h + b1_ref[...], 0.0).astype(h_ref.dtype)

    y = jnp.dot(h_ref[...], w2_ref[...], preferred_element_type=jnp.float32)
    o_ref[...] = (y + b2_ref[...]).astype(o_ref.dtype)


# ----------------------------------------------------------------------------
# Tiling / VMEM planning
# ----------------------------------------------------------------------------
def _usable_vmem_bytes():
    """Per-generation usable VMEM (physical capacity minus Mosaic headroom)."""
    cap = None
    try:
        cap = getattr(pltpu.get_tpu_info(), "vmem_capacity_bytes", None)
    except Exception:
        cap = None
    if not cap:
        cap = 64 << 20              # conservative fallback: v7x physical VMEM
    # Headroom for Mosaic internal scratch / semaphores / metadata.
    return max(int(cap) - (16 << 20), 24 << 20)


def _plan_tiles(M, H, H2, V, nH, x_bytes, w_bytes, h_bytes, o_bytes,
                tm_target, tn_target):
    usable = _usable_vmem_bytes()

    # ---- vocab tile: prefer a lane-dense tile that divides V (no padding) ---
    if V % 128 == 0:
        tn = max(128, (min(tn_target, V) // 128) * 128)
        while V % tn:
            tn -= 128
        v_pad = 0
    elif V >= 128:
        tn = max(128, (min(tn_target, V) // 128) * 128)
        v_pad = 0                   # ragged final vocab block (grid = cdiv)
    else:
        tn = 128                    # tiny V (value head): pad to one lane tile
        v_pad = 128 - V

    # ---- W1 buffering: it only changes on the outermost head axis, so a
    #      second buffer is wasted VMEM once the block gets big --------------
    w1_blk = H * H2 * w_bytes
    w1_bufs = 1 if w1_blk > (2 << 20) else 2
    # TODO(synk): tile W1 along H2 when w1_blk alone exceeds ~usable/2
    # (roughly H >= 4k bf16 on v7x) instead of requiring full residency.

    # ---- row tile: largest target that fits the VMEM budget ----------------
    fixed = w1_bufs * (w1_blk + H2 * 4) + 2 * (H2 * tn * w_bytes + tn * 4)
    per_row = 2 * H * x_bytes + H2 * h_bytes + 2 * tn * o_bytes
    tm = max(8, int(tm_target))
    while tm > 8 and fixed + tm * per_row > usable:
        tm //= 2
    tm = max(8, (tm // 8) * 8)
    if M < 8:
        tm = M                                  # block == full row extent
    else:
        tm = min(tm, max(8, (M // 8) * 8))      # multiple of 8, <= M
    # Megacore balance: with nH == 1 (value head) the row axis must carry the
    # cross-TensorCore split.
    if nH * ((M + tm - 1) // tm) < 2 and M > 8:
        tm = max(8, _round_up((M + 1) // 2, 8))

    need = fixed + tm * per_row
    vmem_limit = int(min(usable, max(32 << 20, need * 5 // 4 + (4 << 20))))
    return tm, tn, v_pad, w1_bufs, vmem_limit


# ----------------------------------------------------------------------------
# Fused multi-head MLP: (Linear -> ReLU -> Linear) for nH stacked heads
# ----------------------------------------------------------------------------
def fused_mlp_heads(x2d, w1s, b1s, w2s, b2s, *, tm=None, tn=None,
                    out_dtype=None):
    """x2d: (M, H); w1s: (nH, H, H2); b1s: (nH, 1, H2); w2s: (nH, H2, V);
    b2s: (nH, 1, V).  Returns (nH, M, V)."""
    M, H = x2d.shape
    nH, _, H2 = w1s.shape
    V = w2s.shape[-1]
    out_dtype = out_dtype or x2d.dtype

    x_bytes = jnp.dtype(x2d.dtype).itemsize
    w_bytes = jnp.dtype(w2s.dtype).itemsize
    h_bytes = w_bytes                      # h scratch lives in the compute dtype
    o_bytes = jnp.dtype(out_dtype).itemsize

    tm, tn, v_pad, w1_bufs, vmem_limit = _plan_tiles(
        M, H, H2, V, nH, x_bytes, w_bytes, h_bytes, o_bytes,
        tm_target=tm or 512, tn_target=tn or 512)

    Vp = V + v_pad
    if v_pad:
        # Only for V < 128 (value head / tiny vocab): keep stores lane-dense.
        w2s = jnp.pad(w2s, ((0, 0), (0, 0), (0, v_pad)))
        b2s = jnp.pad(b2s, ((0, 0), (0, 0), (0, v_pad)))

    grid = (nH, pl.cdiv(M, tm), pl.cdiv(Vp, tn))

    if w1_bufs == 1:
        # Single-buffer W1: its block index only changes on the head axis.
        w1_spec = pl.BlockSpec((None, H, H2), lambda g, i, j: (g, 0, 0),
                               pipeline_mode=pl.Buffered(1))
    else:
        w1_spec = pl.BlockSpec((None, H, H2), lambda g, i, j: (g, 0, 0))

    n_row_tiles = pl.cdiv(M, tm)
    flops = 2 * nH * M * (H * H2 + H2 * Vp)
    bytes_accessed = int(
        nH * M * H * x_bytes                         # x re-read per head
        + nH * H * H2 * w_bytes                      # W1 once per head
        + nH * n_row_tiles * H2 * Vp * w_bytes       # W2 once per row tile/head
        + nH * M * Vp * o_bytes)                     # output writeback

    out = pl.pallas_call(
        _fused_heads_kernel,
        out_shape=jax.ShapeDtypeStruct((nH, M, Vp), out_dtype),
        grid_spec=pltpu.PrefetchScalarGridSpec(
            num_scalar_prefetch=0,
            grid=grid,
            in_specs=[
                pl.BlockSpec((tm, H), lambda g, i, j: (i, 0)),            # x rows
                w1_spec,                                                  # W1
                pl.BlockSpec((None, 1, H2), lambda g, i, j: (g, 0, 0)),   # b1
                pl.BlockSpec((None, H2, tn), lambda g, i, j: (g, 0, j)),  # W2 tile
                pl.BlockSpec((None, 1, tn), lambda g, i, j: (g, 0, j)),   # b2 tile
            ],
            out_specs=pl.BlockSpec((None, tm, tn), lambda g, i, j: (g, i, j)),
            scratch_shapes=[pltpu.VMEM((tm, H2), w2s.dtype)],
        ),
        compiler_params=pltpu.CompilerParams(
            dimension_semantics=("parallel", "parallel", "arbitrary"),
            vmem_limit_bytes=vmem_limit,
        ),
        cost_estimate=pl.CostEstimate(flops=int(flops), transcendentals=0,
                                      bytes_accessed=bytes_accessed),
    )(x2d, w1s, b1s, w2s, b2s)

    if v_pad:
        out = out[:, :, :V]
    return out


# ----------------------------------------------------------------------------
# Parameter construction (deterministic, synthetic -- mirrors module __init__)
# ----------------------------------------------------------------------------
def _init_head_params(key, in_size, out_size, dtype=jnp.float32):
    """make_parallel_head(in_size, out): Linear(in, 2*in) -> ReLU -> Linear(2*in, out)."""
    h2 = 2 * in_size
    k1, k2, k3, k4 = jax.random.split(key, 4)
    b1_bound = 1.0 / jnp.sqrt(jnp.float32(in_size))
    b2_bound = 1.0 / jnp.sqrt(jnp.float32(h2))
    # weights stored transposed to (in, out) for x @ W
    w1 = jax.random.uniform(k1, (in_size, h2), dtype, -b1_bound, b1_bound)
    b1 = jax.random.uniform(k2, (1, h2), dtype, -b1_bound, b1_bound)
    w2 = jax.random.uniform(k3, (h2, out_size), dtype, -b2_bound, b2_bound)
    b2 = jax.random.uniform(k4, (1, out_size), dtype, -b2_bound, b2_bound)
    return {"w1": w1, "b1": b1, "w2": w2, "b2": b2}


def init_ilql_heads_params(key, hidden_size, vocab_size, two_qs=True):
    n_qs = 2 if two_qs else 1
    keys = jax.random.split(key, n_qs + 1)
    q_heads = [_init_head_params(keys[i], hidden_size, vocab_size)
               for i in range(n_qs)]
    # deepcopy semantics: target heads start as exact copies of the q heads
    target_q_heads = [jax.tree_util.tree_map(lambda t: t.copy(), p)
                      for p in q_heads]
    v_head = _init_head_params(keys[n_qs], hidden_size, 1)
    return {"q_heads": q_heads, "target_q_heads": target_q_heads,
            "v_head": v_head}


# ----------------------------------------------------------------------------
# Forward (matches ParallelILQLHeads.forward)
# ----------------------------------------------------------------------------
def ilql_heads_forward(params, hidden_states, *, tm=None, tn=None,
                       compute_dtype=None, skip_targets_if_synced=False):
    """hidden_states: (T, N, H) -> (qs, target_qs, vs), each (N, T, ...).

    compute_dtype: optional (e.g. jnp.bfloat16) -- MXU inputs (weights +
        activations) are cast, accumulation stays f32, biases stay f32.
    skip_targets_if_synced: caller contract -- if target heads are known to be
        exact copies of the q heads, reuse qs instead of recomputing.
    """
    T, N, H = hidden_states.shape
    out_dtype = hidden_states.dtype

    # N-major rows so every head's output already has the 'T N ... -> N T ...'
    # layout; only the cheap H-wide input is transposed, never V-wide outputs.
    x2d = jnp.transpose(hidden_states, (1, 0, 2)).reshape(N * T, H)

    q_heads = list(params["q_heads"])
    n_qs = len(q_heads)
    heads = q_heads if skip_targets_if_synced \
        else q_heads + list(params["target_q_heads"])

    def stack(name):
        return jnp.stack([p[name] for p in heads])

    w1s, b1s, w2s, b2s = stack("w1"), stack("b1"), stack("w2"), stack("b2")
    V = w2s.shape[-1]

    x_in = x2d
    if compute_dtype is not None:
        x_in = x2d.astype(compute_dtype)
        w1s = w1s.astype(compute_dtype)
        w2s = w2s.astype(compute_dtype)

    # One fused pallas_call for all q / target-q heads.
    q_out = fused_mlp_heads(x_in, w1s, b1s, w2s, b2s, tm=tm, tn=tn,
                            out_dtype=out_dtype)          # (len(heads), N*T, V)
    q_out = q_out.reshape(len(heads), N, T, V)
    qs = tuple(q_out[i] for i in range(n_qs))
    target_qs = qs if skip_targets_if_synced else \
        tuple(q_out[n_qs + i] for i in range(n_qs))

    # Value head: own weights, V == 1 (padded to 128 lanes inside
    # fused_mlp_heads so stores stay lane-dense).
    vp = params["v_head"]
    vw1, vw2 = vp["w1"][None], vp["w2"][None]
    if compute_dtype is not None:
        vw1 = vw1.astype(compute_dtype)
        vw2 = vw2.astype(compute_dtype)
    v_out = fused_mlp_heads(x_in, vw1, vp["b1"][None], vw2, vp["b2"][None],
                            tm=tm, out_dtype=out_dtype)    # (1, N*T, 1)
    vs = v_out[0].reshape(N, T, 1)
    return qs, target_qs, vs


# ----------------------------------------------------------------------------
# Reference (pure JAX) for sanity checking
# ----------------------------------------------------------------------------
def _ref_head(p, x2d):
    h = jnp.maximum(x2d @ p["w1"] + p["b1"], 0.0)
    return h @ p["w2"] + p["b2"]


if __name__ == "__main__":
    T, N, H, V = 8, 2, 32, 48          # seq, batch, hidden, vocab (small)
    key = jax.random.PRNGKey(0)
    k_param, k_x, k_extra = jax.random.split(key, 3)

    params = init_ilql_heads_params(k_param, H, V, two_qs=True)
    hidden_states = jax.random.normal(k_x, (T, N, H), jnp.float32)

    # --- fp32 path: exact vs reference --------------------------------------
    qs, target_qs, vs = jax.block_until_ready(
        ilql_heads_forward(params, hidden_states))

    assert len(qs) == 2 and len(target_qs) == 2
    assert qs[0].shape == (N, T, V)
    assert target_qs[0].shape == (N, T, V)
    assert vs.shape == (N, T, 1)

    x2d = jnp.transpose(hidden_states, (1, 0, 2)).reshape(N * T, H)
    for i, p in enumerate(params["q_heads"]):
        ref = _ref_head(p, x2d).reshape(N, T, V)
        assert jnp.allclose(qs[i], ref, atol=1e-5, rtol=1e-5)
        assert jnp.allclose(target_qs[i], ref, atol=1e-5, rtol=1e-5)
    ref_v = _ref_head(params["v_head"], x2d).reshape(N, T, 1)
    assert jnp.allclose(vs, ref_v, atol=1e-5, rtol=1e-5)

    # --- bf16 MXU-input path (f32 accumulation): loose tolerance -------------
    qs_bf, tq_bf, vs_bf = jax.block_until_ready(
        ilql_heads_forward(params, hidden_states, compute_dtype=jnp.bfloat16))
    ref0 = _ref_head(params["q_heads"][0], x2d).reshape(N, T, V)
    assert qs_bf[0].shape == (N, T, V) and vs_bf.shape == (N, T, 1)
    assert jnp.allclose(qs_bf[0], ref0, atol=5e-2, rtol=5e-2)

    # --- ragged row / vocab tiles (no pad, no slice path) --------------------
    M2, V2 = 40, 160                      # 40 rows with tm=16, 160 cols tn=128
    xk, pk = jax.random.split(k_extra)
    x_extra = jax.random.normal(xk, (M2, H), jnp.float32)
    hp = _init_head_params(pk, H, V2)
    out_extra = jax.block_until_ready(
        fused_mlp_heads(x_extra, hp["w1"][None], hp["b1"][None],
                        hp["w2"][None], hp["b2"][None], tm=16))
    ref_extra = _ref_head(hp, x_extra)
    assert out_extra.shape == (1, M2, V2)
    assert jnp.allclose(out_extra[0], ref_extra, atol=1e-5, rtol=1e-5)

    print("KERNEL_OK")
</pallas_src>

<mosaic_0001>
module attributes {stable_mosaic.version = 11 : i64} {
  func.func @_fused_heads_kernel(%arg0: i32, %arg1: i32, %arg2: i32, %arg3: memref<16x32xf32, #tpu.memory_space<vmem>>, %arg4: memref<1x32x64xf32, #tpu.memory_space<vmem>>, %arg5: memref<1x1x64xf32, #tpu.memory_space<vmem>>, %arg6: memref<1x64x128xf32, #tpu.memory_space<vmem>>, %arg7: memref<1x1x128xf32, #tpu.memory_space<vmem>>, %arg8: memref<1x16x128xf32, #tpu.memory_space<vmem>>, %arg9: memref<16x64xf32, #tpu.memory_space<vmem>>) attributes {dimension_semantics = [#tpu.dimension_semantics<parallel>, #tpu.dimension_semantics<parallel>, #tpu.dimension_semantics<arbitrary>], iteration_bounds = array<i64: 4, 1, 1>, scalar_prefetch = 0 : i64, scratch_operands = 1 : i64, tpu.core_type = #tpu.core_type<tc>, window_params = [{transform_indices = @transform_0, window_bounds = array<i64: 16, 32>}, {transform_indices = @transform_1, window_bounds = array<i64: 1, 32, 64>}, {transform_indices = @transform_2, window_bounds = array<i64: 1, 1, 64>}, {transform_indices = @transform_3, window_bounds = array<i64: 1, 64, 128>}, {transform_indices = @transform_4, window_bounds = array<i64: 1, 1, 128>}, {transform_indices = @transform_5, window_bounds = array<i64: 1, 16, 128>}]} {
    %c0_i32 = arith.constant 0 : i32
    %0 = arith.cmpi eq, %arg2, %c0_i32 : i32
    %1 = arith.extui %0 : i1 to i32
    %c0_i32_0 = arith.constant 0 : i32
    %2 = arith.cmpi ne, %1, %c0_i32_0 : i32
    scf.if %2 {
      %c0_11 = arith.constant 0 : index
      %c0_12 = arith.constant 0 : index
      %14 = vector.load %arg3[%c0_11, %c0_12] : memref<16x32xf32, #tpu.memory_space<vmem>>, vector<16x32xf32>
      %c0_13 = arith.constant 0 : index
      %c0_14 = arith.constant 0 : index
      %c0_15 = arith.constant 0 : index
      %15 = vector.load %arg4[%c0_13, %c0_14, %c0_15] : memref<1x32x64xf32, #tpu.memory_space<vmem>>, vector<1x32x64xf32>
      %16 = vector.shape_cast %15 : vector<1x32x64xf32> to vector<32x64xf32>
      %cst_16 = arith.constant dense<0.000000e+00> : vector<16x64xf32>
      %17 = tpu.matmul %14, %16, %cst_16 {dimension_numbers = #tpu.dot_dimension_numbers<[1], [0], [0], [1], [0, 0, 1, 1], [], []>} : vector<16x32xf32>, vector<32x64xf32>, vector<16x64xf32> -> vector<16x64xf32>
      %c0_17 = arith.constant 0 : index
      %c0_18 = arith.constant 0 : index
      %c0_19 = arith.constant 0 : index
      %18 = vector.load %arg5[%c0_17, %c0_18, %c0_19] : memref<1x1x64xf32, #tpu.memory_space<vmem>>, vector<1x1x64xf32>
      %19 = vector.shape_cast %18 : vector<1x1x64xf32> to vector<1x64xf32>
      %20 = vector.broadcast %19 : vector<1x64xf32> to vector<16x64xf32>
      %21 = arith.addf %17, %20 : vector<16x64xf32>
      %cst_20 = arith.constant 0.000000e+00 : f32
      %22 = vector.broadcast %cst_20 : f32 to vector<16x64xf32>
      %23 = arith.maximumf %21, %22 : vector<16x64xf32>
      %c0_21 = arith.constant 0 : index
      %c0_22 = arith.constant 0 : index
      %24 = vector.load %arg9[%c0_21, %c0_22] : memref<16x64xf32, #tpu.memory_space<vmem>>, vector<16x64xf32>
      tpu.vector_store %arg9[%c0_21, %c0_22], %23 {strides = array<i32>} : memref<16x64xf32, #tpu.memory_space<vmem>>, vector<16x64xf32>,
    } else {
    }
    %c0 = arith.constant 0 : index
    %c0_1 = arith.constant 0 : index
    %3 = vector.load %arg9[%c0, %c0_1] : memref<16x64xf32, #tpu.memory_space<vmem>>, vector<16x64xf32>
    %c0_2 = arith.constant 0 : index
    %c0_3 = arith.constant 0 : index
    %c0_4 = arith.constant 0 : index
    %4 = vector.load %arg6[%c0_2, %c0_3, %c0_4] : memref<1x64x128xf32, #tpu.memory_space<vmem>>, vector<1x64x128xf32>
    %5 = vector.shape_cast %4 : vector<1x64x128xf32> to vector<64x128xf32>
    %cst = arith.constant dense<0.000000e+00> : vector<16x128xf32>
    %6 = tpu.matmul %3, %5, %cst {dimension_numbers = #tpu.dot_dimension_numbers<[1], [0], [0], [1], [0, 0, 1, 1], [], []>} : vector<16x64xf32>, vector<64x128xf32>, vector<16x128xf32> -> vector<16x128xf32>
    %c0_5 = arith.constant 0 : index
    %c0_6 = arith.constant 0 : index
    %c0_7 = arith.constant 0 : index
    %7 = vector.load %arg7[%c0_5, %c0_6, %c0_7] : memref<1x1x128xf32, #tpu.memory_space<vmem>>, vector<1x1x128xf32>
    %8 = vector.shape_cast %7 : vector<1x1x128xf32> to vector<1x128xf32>
    %9 = vector.broadcast %8 : vector<1x128xf32> to vector<16x128xf32>
    %10 = arith.addf %6, %9 : vector<16x128xf32>
    %c0_8 = arith.constant 0 : index
    %c0_9 = arith.constant 0 : index
    %c0_10 = arith.constant 0 : index
    %11 = vector.load %arg8[%c0_8, %c0_9, %c0_10] : memref<1x16x128xf32, #tpu.memory_space<vmem>>, vector<1x16x128xf32>
    %12 = vector.shape_cast %11 : vector<1x16x128xf32> to vector<16x128xf32>
    %13 = vector.shape_cast %10 : vector<16x128xf32> to vector<1x16x128xf32>
    tpu.vector_store %arg8[%c0_8, %c0_9, %c0_10], %13 {strides = array<i32>} : memref<1x16x128xf32, #tpu.memory_space<vmem>>, vector<1x16x128xf32>,
    return
  }
  func.func @transform_0(%arg0: i32, %arg1: i32, %arg2: i32) -> (i32, i32) {
    %c0_i32 = arith.constant 0 : i32
    %c0_i32_0 = arith.constant 0 : i32
    return %arg1, %c0_i32 : i32, i32
  }
  func.func @transform_1(%arg0: i32, %arg1: i32, %arg2: i32) -> (i32, i32, i32) {
    %c0_i32 = arith.constant 0 : i32
    %c0_i32_0 = arith.constant 0 : i32
    %c0_i32_1 = arith.constant 0 : i32
    return %arg0, %c0_i32, %c0_i32_0 : i32, i32, i32
  }
  func.func @transform_2(%arg0: i32, %arg1: i32, %arg2: i32) -> (i32, i32, i32) {
    %c0_i32 = arith.constant 0 : i32
    %c0_i32_0 = arith.constant 0 : i32
    %c0_i32_1 = arith.constant 0 : i32
    return %arg0, %c0_i32, %c0_i32_0 : i32, i32, i32
  }
  func.func @transform_3(%arg0: i32, %arg1: i32, %arg2: i32) -> (i32, i32, i32) {
    %c0_i32 = arith.constant 0 : i32
    %c0_i32_0 = arith.constant 0 : i32
    return %arg0, %c0_i32, %arg2 : i32, i32, i32
  }
  func.func @transform_4(%arg0: i32, %arg1: i32, %arg2: i32) -> (i32, i32, i32) {
    %c0_i32 = arith.constant 0 : i32
    %c0_i32_0 = arith.constant 0 : i32
    return %arg0, %c0_i32, %arg2 : i32, i32, i32
  }
  func.func @transform_5(%arg0: i32, %arg1: i32, %arg2: i32) -> (i32, i32, i32) {
    %c0_i32 = arith.constant 0 : i32
    return %arg0, %arg1, %arg2 : i32, i32, i32
  }
}

</mosaic_0001>

<llo_original>
// kernel: tpu_custom_call.1
$region0: #{tpu_custom_call.1}
  #allocation0 [shape = 'u32[]', space=smem, size = 0x4, offset = 0x4, fixed_abs, tag = 'smem constant byte address 0x4 - core index']
  #allocation1 [shape = 'u32[144,128]{1,0:T(1,128)}', space=vmem, size = 0x12000, scoped, tag = 'internal scratch']
  #allocation2 [shape = 'f32[16,64]{1,0:T(8,128)}', space=vmem, size = 0x2000, scoped, tag = 'scratch operand']
  %s0 = inlined_call_operand.hbm [shape: f32[16,32], index: 0, kind: input, shape index: {}]
  %s1 = inlined_call_operand.hbm [shape: f32[4,32,64], index: 1, kind: input, shape index: {}]
  %s2 = inlined_call_operand.vmem [shape: f32[4,1,64], index: 2, kind: input, shape index: {}]
  %s3 = inlined_call_operand.hbm [shape: f32[4,64,128], index: 3, kind: input, shape index: {}]
  %s4 = inlined_call_operand.vmem [shape: f32[4,1,128], index: 4, kind: input, shape index: {}]
  %s5 = inlined_call_operand.hbm [shape: f32[4,16,128], index: 5, kind: output, shape index: {}]
  %s6 = sld [smem:[#allocation0]]
  $region69: #{tpu_custom_call.1} parent=0
    _
  %s8 = ssub.s32 1, %s6
  %s9 = scalar_select 0, %s8, %s6
  $region1: #{tpu_custom_call.1} parent=0
    #allocation3 [shape = 'u8[8192]{0}', space=vmem, size = 0x2000, scoped, tag = 'input window, operand 0, single buffered']
    #allocation4 [shape = 's32[2]{0}', space=sflag, size = 0x8, scoped, tag = 'scoped memory for tpu_custom_call.1']
    #allocation5 [shape = 's32[2]{0}', space=sflag, size = 0x8, scoped, tag = 'scoped memory for tpu_custom_call.1']
    #allocation6 [shape = 'u8[32768]{0}', space=vmem, size = 0x8000, scoped, tag = 'input window, operand 1']
    #allocation7 [shape = 's32[2]{0}', space=sflag, size = 0x8, scoped, tag = 'scoped memory for tpu_custom_call.1']
    #allocation8 [shape = 'u8[65536]{0}', space=vmem, size = 0x10000, scoped, tag = 'input window, operand 3']
    #allocation9 [shape = 'u8[16384]{0}', space=vmem, size = 0x4000, scoped, tag = 'output window, operand 0']
    %10 = vsyncpa [#allocation4], 0
    %11 = vsyncpa [#allocation7], 0
    %s12 = scalar_lea.sflag [#allocation7], 1
    %13 = vsyncpa %s12, 0
    %14 = vsyncpa [#allocation5], 0
    %s15 = scalar_lea.sflag [#allocation5], 1
    %16 = vsyncpa %s15, 0
    loop: start=0, step=1, limit=6
    $region2: #{tpu_custom_call.1} parent=1 // loop_pre_header
      _
    $region3: #{tpu_custom_call.1} parent=1 // loop_header
      %s18 = sphi 0, %s22
      %p19 = scmp.ge.s32.totalorder %s18, 6
      %s25 = sphi 0, %s44
      %s26 = sphi 0, %s40
      %s27 = sphi 0, %s36
      %s28 = sphi 0, %s25
      %s29 = sphi 0, %s26
      %s30 = sphi 0, %s27
      %s31 = sphi 0, %s28
      %s32 = sphi 0, %s29
      %s33 = sphi 0, %s30
      %s47 = sphi 0, %s49
      %s50 = sphi 0, %s47
      %s51 = sphi 0, %s50
      %s67 = sphi 0, %s51
      %s73 = sphi 0, %s75
      %s76 = sphi 0, %s73
      %s77 = sphi 0, %s76
      %s93 = sphi 0, %s77
      %s99 = sphi 0, %s101
      %s102 = sphi 0, %s99
      %s103 = sphi 0, %s102
      %s119 = sphi 0, %s103
      %s127 = sphi 0, %s129
      %s130 = sphi 0, %s127
      %s131 = sphi 0, %s130
      %s147 = sphi 0, %s131
      %s155 = sphi 0, %s157
      %s158 = sphi 0, %s155
      %s159 = sphi 0, %s158
      %s175 = sphi 0, %s159
      %s185 = sphi 0, %s187
      %s188 = sphi 0, %s185
      %s189 = sphi 0, %s188
      %s205 = sphi 0, %s189
    $region4: #{tpu_custom_call.1} parent=1 // loop_header_branch
      %21 = sbr.rel (%p19) target = $region8
    $region5: #{tpu_custom_call.1} parent=1 // loop_body
      %s23 = ssub.s32 %s18, 1
      %s24 = ssub.s32 %s18, 2
      %s34 = sadd.s32 1, %s27
      %p35 = scmp.ge.s32.totalorder %s34, 1
      %s36 = scalar_select %p35, 0, %s34
      %s37 = sadd.s32 1, %s26
      %s38 = scalar_select %p35, %s37, %s26
      %p39 = scmp.ge.s32.totalorder %s38, 1
      %s40 = scalar_select %p39, 0, %s38
      %s41 = sadd.s32 1, %s25
      %s42 = scalar_select %p39, %s41, %s25
      %p43 = scmp.ge.s32.totalorder %s42, 4
      %s44 = scalar_select %p43, 0, %s42
      %s45 = ssub.s32 %s26, %s40
      %p46 = scmp.eq.s32.totalorder %s45, 0
      %s48 = sadd.s32 %s47, 1
      %s49 = scalar_select %p46, %s47, %s48
      %p52 = pneg %p46
      %p53 = scmp.eq.s32.totalorder %s18, 3
      %p54 = por %p52, %p53
      %p55 = scmp.ne.s32.totalorder %s47, %s50
      %p56 = scmp.eq.s32.totalorder %s18, 0
      %p57 = por %p55, %p56
      %p58 = scmp.ne.s32.totalorder %s47, %s50
      %p59 = scmp.eq.s32.totalorder %s23, 3
      %p60 = por %p58, %p59
      %p61 = scmp.ne.s32.totalorder %s50, %s51
      %p62 = scmp.eq.s32.totalorder %s23, 0
      %p63 = por %p61, %p62
      %p64 = scmp.ne.s32.totalorder %s50, %s51
      %p65 = scmp.eq.s32.totalorder %s24, 3
      %p66 = por %p64, %p65
      %p68 = scmp.ne.s32.totalorder %s51, %s67
      %p69 = scmp.eq.s32.totalorder %s24, 0
      %p70 = por %p68, %p69
      %s71 = ssub.s32 %s25, %s44
      %p72 = scmp.eq.s32.totalorder %s71, 0
      %s74 = sadd.s32 %s73, 1
      %s75 = scalar_select %p72, %s73, %s74
      %p78 = pneg %p72
      %p79 = scmp.eq.s32.totalorder %s18, 3
      %p80 = por %p78, %p79
      %p81 = scmp.ne.s32.totalorder %s73, %s76
      %p82 = scmp.eq.s32.totalorder %s18, 0
      %p83 = por %p81, %p82
      %p84 = scmp.ne.s32.totalorder %s73, %s76
      %p85 = scmp.eq.s32.totalorder %s23, 3
      %p86 = por %p84, %p85
      %p87 = scmp.ne.s32.totalorder %s76, %s77
      %p88 = scmp.eq.s32.totalorder %s23, 0
      %p89 = por %p87, %p88
      %p90 = scmp.ne.s32.totalorder %s76, %s77
      %p91 = scmp.eq.s32.totalorder %s24, 3
      %p92 = por %p90, %p91
      %p94 = scmp.ne.s32.totalorder %s77, %s93
      %p95 = scmp.eq.s32.totalorder %s24, 0
      %p96 = por %p94, %p95
      %s97 = ssub.s32 %s25, %s44
      %p98 = scmp.eq.s32.totalorder %s97, 0
      %s100 = sadd.s32 %s99, 1
      %s101 = scalar_select %p98, %s99, %s100
      %p104 = pneg %p98
      %p105 = scmp.eq.s32.totalorder %s18, 3
      %p106 = por %p104, %p105
      %p107 = scmp.ne.s32.totalorder %s99, %s102
      %p108 = scmp.eq.s32.totalorder %s18, 0
      %p109 = por %p107, %p108
      %p110 = scmp.ne.s32.totalorder %s99, %s102
      %p111 = scmp.eq.s32.totalorder %s23, 3
      %p112 = por %p110, %p111
      %p113 = scmp.ne.s32.totalorder %s102, %s103
      %p114 = scmp.eq.s32.totalorder %s23, 0
      %p115 = por %p113, %p114
      %p116 = scmp.ne.s32.totalorder %s102, %s103
      %p117 = scmp.eq.s32.totalorder %s24, 3
      %p118 = por %p116, %p117
      %p120 = scmp.ne.s32.totalorder %s103, %s119
      %p121 = scmp.eq.s32.totalorder %s24, 0
      %p122 = por %p120, %p121
      %s123 = ssub.s32 %s25, %s44
      %s124 = ssub.s32 %s27, %s36
      %s125 = sor.u32 %s123, %s124
      %p126 = scmp.eq.s32.totalorder %s125, 0
      %s128 = sadd.s32 %s127, 1
      %s129 = scalar_select %p126, %s127, %s128
      %p132 = pneg %p126
      %p133 = scmp.eq.s32.totalorder %s18, 3
      %p134 = por %p132, %p133
      %p135 = scmp.ne.s32.totalorder %s127, %s130
      %p136 = scmp.eq.s32.totalorder %s18, 0
      %p137 = por %p135, %p136
      %p138 = scmp.ne.s32.totalorder %s127, %s130
      %p139 = scmp.eq.s32.totalorder %s23, 3
      %p140 = por %p138, %p139
      %p141 = scmp.ne.s32.totalorder %s130, %s131
      %p142 = scmp.eq.s32.totalorder %s23, 0
      %p143 = por %p141, %p142
      %p144 = scmp.ne.s32.totalorder %s130, %s131
      %p145 = scmp.eq.s32.totalorder %s24, 3
      %p146 = por %p144, %p145
      %p148 = scmp.ne.s32.totalorder %s131, %s147
      %p149 = scmp.eq.s32.totalorder %s24, 0
      %p150 = por %p148, %p149
      %s151 = ssub.s32 %s25, %s44
      %s152 = ssub.s32 %s27, %s36
      %s153 = sor.u32 %s151, %s152
      %p154 = scmp.eq.s32.totalorder %s153, 0
      %s156 = sadd.s32 %s155, 1
      %s157 = scalar_select %p154, %s155, %s156
      %p160 = pneg %p154
      %p161 = scmp.eq.s32.totalorder %s18, 3
      %p162 = por %p160, %p161
      %p163 = scmp.ne.s32.totalorder %s155, %s158
      %p164 = scmp.eq.s32.totalorder %s18, 0
      %p165 = por %p163, %p164
      %p166 = scmp.ne.s32.totalorder %s155, %s158
      %p167 = scmp.eq.s32.totalorder %s23, 3
      %p168 = por %p166, %p167
      %p169 = scmp.ne.s32.totalorder %s158, %s159
      %p170 = scmp.eq.s32.totalorder %s23, 0
      %p171 = por %p169, %p170
      %p172 = scmp.ne.s32.totalorder %s158, %s159
      %p173 = scmp.eq.s32.totalorder %s24, 3
      %p174 = por %p172, %p173
      %p176 = scmp.ne.s32.totalorder %s159, %s175
      %p177 = scmp.eq.s32.totalorder %s24, 0
      %p178 = por %p176, %p177
      %s179 = ssub.s32 %s25, %s44
      %s180 = ssub.s32 %s26, %s40
      %s181 = sor.u32 %s179, %s180
      %s182 = ssub.s32 %s27, %s36
      %s183 = sor.u32 %s181, %s182
      %p184 = scmp.eq.s32.totalorder %s183, 0
      %s186 = sadd.s32 %s185, 1
      %s187 = scalar_select %p184, %s185, %s186
      %p190 = pneg %p184
      %p191 = scmp.eq.s32.totalorder %s18, 3
      %p192 = por %p190, %p191
      %p193 = scmp.ne.s32.totalorder %s185, %s188
      %p194 = scmp.eq.s32.totalorder %s18, 0
      %p195 = por %p193, %p194
      %p196 = scmp.ne.s32.totalorder %s185, %s188
      %p197 = scmp.eq.s32.totalorder %s23, 3
      %p198 = por %p196, %p197
      %p199 = scmp.ne.s32.totalorder %s188, %s189
      %p200 = scmp.eq.s32.totalorder %s23, 0
      %p201 = por %p199, %p200
      %p202 = scmp.ne.s32.totalorder %s188, %s189
      %p203 = scmp.eq.s32.totalorder %s24, 3
      %p204 = por %p202, %p203
      %p206 = scmp.ne.s32.totalorder %s189, %s205
      %p207 = scmp.eq.s32.totalorder %s24, 0
      %p208 = por %p206, %p207
      %p209 = scmp.le.s32.totalorder 1, %s18
      %p210 = scmp.lt.s32.totalorder %s18, 5
      %p211 = pnand %p209, %p210
      %p212 = pneg %p211
      // Predicated region
      $region9: #{tpu_custom_call.1} parent=5 // pred_check
        _
      $region10: #{tpu_custom_call.1} parent=5 // pred_check_branch
        %214 = sbr.rel (%p211) target = $region12
      $region11: #{tpu_custom_call.1} parent=5 // pred_region
        %s215 = ssub.s32 %s18, 1
        // Predicated region
        $region13: #{tpu_custom_call.1} parent=11 // pred_check
          %p216 = pneg %p63
        $region14: #{tpu_custom_call.1} parent=11 // pred_check_branch
          %218 = sbr.rel (%p216) target = $region16
        $region15: #{tpu_custom_call.1} parent=11 // pred_region
          %s219 = smul.u32 2, %s29
          %s221 = ssub.s32 256, 256
          %222 = vsyncadd [#allocation4], %s221
          %s223 = smul.addr %s219, 128
          %s224 = scalar_lea.hbm %s0, %s223
          %s225 = sshll.u32 [#allocation3], 4
          %s226 = int_to_ptr.vmem [resolvable:$true] %s225
          %231 = dma.hbm_to_vmem [thread:$0]  %s224, 256, %s226, [#allocation4], 128, 128, 8
        $region16: #{tpu_custom_call.1} parent=11 // pred_fallthru
          _
      $region12: #{tpu_custom_call.1} parent=5 // pred_fallthru
        _
      %p232 = scmp.lt.s32.totalorder %s18, 4
      // Predicated region
      $region17: #{tpu_custom_call.1} parent=5 // pred_check
        %p233 = pneg %p232
      $region18: #{tpu_custom_call.1} parent=5 // pred_check_branch
        %235 = sbr.rel (%p233) target = $region20
      $region19: #{tpu_custom_call.1} parent=5 // pred_region
        // Predicated region
        $region21: #{tpu_custom_call.1} parent=19 // pred_check
          %p236 = pneg %p83
        $region22: #{tpu_custom_call.1} parent=19 // pred_check_branch
          %238 = sbr.rel (%p236) target = $region24
        $region23: #{tpu_custom_call.1} parent=19 // pred_region
          %s239 = sand.u32 %s18, 1
          %s240 = scalar_lea.sflag [#allocation7], %s239
          %s241 = sand.u32 %s73, 1
          %s242 = smul.addr %s241, 32
          %s243 = scalar_lea.vmem [#allocation6], %s242
          %s245 = ssub.s32 512, 512
          %246 = vsyncadd %s240, %s245
          %s247 = smul.addr %s25, 4
          %s248 = smul.addr %s247, 128
          %s249 = scalar_lea.hbm %s1, %s248
          %s250 = sshll.u32 %s243, 4
          %s251 = int_to_ptr.vmem [resolvable:$true] %s250
          %256 = dma.hbm_to_vmem [thread:$0]  %s249, 512, %s251, %s240, 128, 128, 8
        $region24: #{tpu_custom_call.1} parent=19 // pred_fallthru
          _
        // Predicated region
        $region25: #{tpu_custom_call.1} parent=19 // pred_check
          %p257 = pneg %p109
        $region26: #{tpu_custom_call.1} parent=19 // pred_check_branch
          %259 = sbr.rel (%p257) target = $region28
        $region27: #{tpu_custom_call.1} parent=19 // pred_region
          %p260 = scmp.lt.s32.totalorder %s25, 3
          %s261 = scalar_select %p260, %s25, 3
          %s262 = scalar_lea.vmem %s2, %s261
        $region28: #{tpu_custom_call.1} parent=19 // pred_fallthru
          _
        // Predicated region
        $region29: #{tpu_custom_call.1} parent=19 // pred_check
          %p263 = pneg %p137
        $region30: #{tpu_custom_call.1} parent=19 // pred_check_branch
          %265 = sbr.rel (%p263) target = $region32
        $region31: #{tpu_custom_call.1} parent=19 // pred_region
          %s266 = sand.u32 %s18, 1
          %s267 = scalar_lea.sflag [#allocation7], %s266
          %s268 = sand.u32 %s127, 1
          %s269 = smul.addr %s268, 64
          %s270 = scalar_lea.vmem [#allocation8], %s269
          %s272 = ssub.s32 1024, 1024
          %273 = vsyncadd %s267, %s272
          %s274 = smul.addr %s25, 8
          %s275 = sadd.s32 %s27, %s274
          %s276 = smul.addr %s275, 128
          %s277 = scalar_lea.hbm %s3, %s276
          %s278 = sshll.u32 %s270, 4
          %s279 = int_to_ptr.vmem [resolvable:$true] %s278
          %284 = dma.hbm_to_vmem [thread:$0]  %s277, 1024, %s279, %s267, 128, 128, 8
        $region32: #{tpu_custom_call.1} parent=19 // pred_fallthru
          _
        // Predicated region
        $region33: #{tpu_custom_call.1} parent=19 // pred_check
          %p285 = pneg %p165
        $region34: #{tpu_custom_call.1} parent=19 // pred_check_branch
          %287 = sbr.rel (%p285) target = $region36
        $region35: #{tpu_custom_call.1} parent=19 // pred_region
          %p288 = scmp.lt.s32.totalorder %s25, 3
          %s289 = scalar_select %p288, %s25, 3
          %p290 = scmp.lt.s32.totalorder %s27, 0
          %s291 = scalar_select %p290, %s27, 0
          %s292 = sadd.s32 %s291, %s289
          %s293 = scalar_lea.vmem %s4, %s292
        $region36: #{tpu_custom_call.1} parent=19 // pred_fallthru
          _
      $region20: #{tpu_custom_call.1} parent=5 // pred_fallthru
        _
      %p294 = scmp.le.s32.totalorder 1, %s18
      %p295 = scmp.lt.s32.totalorder %s18, 5
      %p296 = pnand %p294, %p295
      %p297 = pneg %p296
      // Predicated region
      $region37: #{tpu_custom_call.1} parent=5 // pred_check
        _
      $region38: #{tpu_custom_call.1} parent=5 // pred_check_branch
        %299 = sbr.rel (%p296) target = $region40
      $region39: #{tpu_custom_call.1} parent=5 // pred_region
        %s300 = ssub.s32 %s18, 1
        // Predicated region
        $region41: #{tpu_custom_call.1} parent=39 // pred_check
          %p301 = pneg %p63
        $region42: #{tpu_custom_call.1} parent=39 // pred_check_branch
          %303 = sbr.rel (%p301) target = $region44
        $region43: #{tpu_custom_call.1} parent=39 // pred_region
          %304 = dma.done [#allocation4], 256
        $region44: #{tpu_custom_call.1} parent=39 // pred_fallthru
          _
        %s305 = sand.u32 %s23, 1
        %s306 = scalar_lea.sflag [#allocation7], %s305
        %s307 = sand.u32 %s76, 1
        %s308 = smul.addr %s307, 32
        %s309 = scalar_lea.vmem [#allocation6], %s308
        // Predicated region
        $region45: #{tpu_custom_call.1} parent=39 // pred_check
          %p310 = pneg %p89
        $region46: #{tpu_custom_call.1} parent=39 // pred_check_branch
          %312 = sbr.rel (%p310) target = $region48
        $region47: #{tpu_custom_call.1} parent=39 // pred_region
          %313 = dma.done %s306, 512
        $region48: #{tpu_custom_call.1} parent=39 // pred_fallthru
          _
        %s314 = sand.u32 %s23, 1
        %s315 = scalar_lea.sflag [#allocation7], %s314
        %s316 = sand.u32 %s130, 1
        %s317 = smul.addr %s316, 64
        %s318 = scalar_lea.vmem [#allocation8], %s317
        // Predicated region
        $region49: #{tpu_custom_call.1} parent=39 // pred_check
          %p319 = pneg %p143
        $region50: #{tpu_custom_call.1} parent=39 // pred_check_branch
          %321 = sbr.rel (%p319) target = $region52
        $region51: #{tpu_custom_call.1} parent=39 // pred_region
          %322 = dma.done %s315, 1024
        $region52: #{tpu_custom_call.1} parent=39 // pred_fallthru
          _
        %p323 = pneg %p63
        %p324 = pneg %p60
        %s325 = sand.u32 %s23, 1
        %s326 = scalar_lea.sflag [#allocation7], %s325
        %s327 = sand.u32 %s76, 1
        %s328 = smul.addr %s327, 32
        %s329 = scalar_lea.vmem [#allocation6], %s328
        %p330 = pneg %p89
        %p331 = pneg %p86
        %p332 = scmp.lt.s32.totalorder %s28, 3
        %s333 = scalar_select %p332, %s28, 3
        %s334 = scalar_lea.vmem %s2, %s333
        %p335 = pneg %p115
        %p336 = pneg %p112
        %s337 = sand.u32 %s23, 1
        %s338 = scalar_lea.sflag [#allocation7], %s337
        %s339 = sand.u32 %s130, 1
        %s340 = smul.addr %s339, 64
        %s341 = scalar_lea.vmem [#allocation8], %s340
        %p342 = pneg %p143
        %p343 = pneg %p140
        %p344 = scmp.lt.s32.totalorder %s28, 3
        %s345 = scalar_select %p344, %s28, 3
        %p346 = scmp.lt.s32.totalorder %s30, 0
        %s347 = scalar_select %p346, %s30, 0
        %s348 = sadd.s32 %s347, %s345
        %s349 = scalar_lea.vmem %s4, %s348
        %p350 = pneg %p171
        %p351 = pneg %p168
        %p352 = pneg %p201
        %p353 = pneg %p198
        %s354 = sand.u32 %s188, 1
        %s355 = scalar_lea.sflag [#allocation5], %s354
        %s356 = sand.u32 %s188, 1
        %s357 = smul.addr %s356, 16
        %s358 = scalar_lea.vmem [#allocation9], %s357
        %s359 = smul.u32 2, %s29
        %p360 = scmp.lt.s32.totalorder %s28, 3
        %s361 = scalar_select %p360, %s28, 3
        %s362 = scalar_lea.vmem %s2, %s361
        %p363 = scmp.lt.s32.totalorder %s28, 3
        %s364 = scalar_select %p363, %s28, 3
        %p365 = scmp.lt.s32.totalorder %s30, 0
        %s366 = scalar_select %p365, %s30, 0
        %s367 = sadd.s32 %s366, %s364
        %s368 = scalar_lea.vmem %s4, %s367
        %s369 = smul.u32 2, %s29
        %p370 = scmp.eq.s32.totalorder %s30, 0
        // Predicated region
        $region53: #{tpu_custom_call.1} parent=39 // pred_check
          %p371 = pneg %p370
        $region54: #{tpu_custom_call.1} parent=39 // pred_check_branch
          %373 = sbr.rel (%p371) target = $region56
        $region55: #{tpu_custom_call.1} parent=39 // pred_region
          %v374 = vld [vmem:[#allocation3] sm:$0xff]
          %v375 = vld [vmem:[#allocation3 + $0x8] sm:$0xff]
          %v376 = vld [vmem:[%s309] sm:$0xff]
          %v377 = vld [vmem:[%s309 + $0x8] sm:$0xff]
          %v378 = vld [vmem:[%s309 + $0x10] sm:$0xff]
          %v379 = vld [vmem:[%s309 + $0x18] sm:$0xff]
          %v380 = vld [vmem:[%s362] sm:$0x1]
          %v382 = vlaneseq
          %v383 = vshrl.u32 %v382, 7
          %v384 = vsub.s32 0, %v383
          %v385 = vrot.slane %v380, %v384
          %vm387 = vcmask 261120
          %v389 = vsel %vm387, %v374, 0
          %v392 = vsel %vm387, %v375, 0
          %394 = vmatprep.subr.mxu0 0.0
          %395 = vmatpush1.msra.mxu0 %v376
          %396 = vmatprep.subr.mxu0 0.0
          %397 = vmatpush1.msra.mxu0 %v377
          %398 = vmatprep.subr.mxu0 0.0
          %399 = vmatpush1.msra.mxu0 %v378
          %400 = vmatprep.subr.mxu0 0.0
          %401 = vmatpush1.msra.mxu0 %v379
          %402 = vmatprep.subr.mxu0 0.0
          %403 = vmatpush1.msra.mxu0 0.0
          %404 = vmatprep.subr.mxu0 0.0
          %405 = vmatpush1.msra.mxu0 0.0
          %406 = vmatprep.subr.mxu0 0.0
          %407 = vmatpush1.msra.mxu0 0.0
          %408 = vmatprep.subr.mxu0 0.0
          %409 = vmatpush1.msra.mxu0 0.0
          %410 = vmatprep.subr.mxu0 0.0
          %411 = vmatpush1.msra.mxu0 0.0
          %412 = vmatprep.subr.mxu0 0.0
          %413 = vmatpush1.msra.mxu0 0.0
          %414 = vmatprep.subr.mxu0 0.0
          %415 = vmatpush1.msra.mxu0 0.0
          %416 = vmatprep.subr.mxu0 0.0
          %417 = vmatpush1.msra.mxu0 0.0
          %418 = vmatprep.subr.mxu0 0.0
          %419 = vmatpush1.msra.mxu0 0.0
          %420 = vmatprep.subr.mxu0 0.0
          %421 = vmatpush1.msra.mxu0 0.0
          %422 = vmatprep.subr.mxu0 0.0
          %423 = vmatpush1.msra.mxu0 0.0
          %424 = vmatprep.subr.mxu0 0.0
          %425 = vmatpush1.msra.mxu0 0.0
          %426 = vmatprep.subr.mxu0 0.0
          %427 = vmatpush1.msra.mxu0 0.0
          %428 = vmatprep.subr.mxu0 0.0
          %429 = vmatpush1.msra.mxu0 0.0
          %430 = vmatprep.subr.mxu0 0.0
          %431 = vmatpush1.msra.mxu0 0.0
          %432 = vmatprep.subr.mxu0 0.0
          %433 = vmatpush1.msra.mxu0 0.0
          %434 = vmatprep.subr.mxu0 0.0
          %435 = vmatpush1.msra.mxu0 0.0
          %436 = vmatprep.subr.mxu0 0.0
          %437 = vmatpush1.msra.mxu0 0.0
          %438 = vmatprep.subr.mxu0 0.0
          %439 = vmatpush1.msra.mxu0 0.0
          %440 = vmatprep.subr.mxu0 0.0
          %441 = vmatpush1.msra.mxu0 0.0
          %442 = vmatprep.subr.mxu0 0.0
          %443 = vmatpush1.msra.mxu0 0.0
          %444 = vmatprep.subr.mxu0 0.0
          %445 = vmatpush1.msra.mxu0 0.0
          %446 = vmatprep.subr.mxu0 0.0
          %447 = vmatpush1.msra.mxu0 0.0
          %448 = vmatprep.subr.mxu0 0.0
          %449 = vmatpush1.msra.mxu0 0.0
          %450 = vmatprep.subr.mxu0 0.0
          %451 = vmatpush1.msra.mxu0 0.0
          %452 = vmatprep.subr.mxu0 0.0
          %453 = vmatpush1.msra.mxu0 0.0
          %454 = vmatprep.subr.mxu0 0.0
          %455 = vmatpush1.msra.mxu0 0.0
          %456 = vmatprep.subr.mxu0 0.0
          %457 = vmatpush1.msra.mxu0 0.0
          %458 = vmatprep.mubr.f32.mxu0 0.0
          %459 = vmatmul.mubr.f32.gmra.mrb[0].mxu0 %v389
          %v460 = vpop.f32.mrb[0].mxu0
          %v461 = vadd.f32 %v385, %v460
          %v462 = vpop.f32.mrb[0].mxu0
          %463 = vmatprep.mubr.f32.mxu0 0.0
          %464 = vmatmul.mubr.f32.gmra.mrb[0].mxu0 %v392
          %v465 = vpop.f32.mrb[0].mxu0
          %v466 = vadd.f32 %v385, %v465
          %v467 = vpop.f32.mrb[0].mxu0
          %468 = vdwg.mxu0
          %v469 = vmax.f32 %v461, 0.0
          %v470 = vmax.f32 %v466, 0.0
          %vm471 = vcmask 523264
          %472 = vst.msk [vmem:[#allocation2] sm:$0xff] %vm471, %v469
          %473 = vst.msk [vmem:[#allocation2 + $0x8] sm:$0xff] %vm471, %v470
        $region56: #{tpu_custom_call.1} parent=39 // pred_fallthru
          _
        %v474 = vld [vmem:[#allocation2] sm:$0xff]
        %v475 = vld [vmem:[#allocation2 + $0x8] sm:$0xff]
        %v476 = vld [vmem:[%s318] sm:$0xff]
        %v477 = vld [vmem:[%s318 + $0x8] sm:$0xff]
        %v478 = vld [vmem:[%s318 + $0x10] sm:$0xff]
        %v479 = vld [vmem:[%s318 + $0x18] sm:$0xff]
        %v480 = vld [vmem:[%s318 + $0x20] sm:$0xff]
        %v481 = vld [vmem:[%s318 + $0x28] sm:$0xff]
        %v482 = vld [vmem:[%s318 + $0x30] sm:$0xff]
        %v483 = vld [vmem:[%s318 + $0x38] sm:$0xff]
        %v484 = vld [vmem:[%s368] sm:$0x1]
        %v486 = vlaneseq
        %v487 = vshrl.u32 %v486, 7
        %v488 = vsub.s32 0, %v487
        %v489 = vrot.slane %v484, %v488
        %vm491 = vcmask 523264
        %v493 = vsel %vm491, %v474, 0
        %v496 = vsel %vm491, %v475, 0
        %498 = vmatprep.subr.mxu0 0.0
        %499 = vmatpush1.msra.mxu0 %v476
        %500 = vmatprep.subr.mxu0 0.0
        %501 = vmatpush1.msra.mxu0 %v477
        %502 = vmatprep.subr.mxu0 0.0
        %503 = vmatpush1.msra.mxu0 %v478
        %504 = vmatprep.subr.mxu0 0.0
        %505 = vmatpush1.msra.mxu0 %v479
        %506 = vmatprep.subr.mxu0 0.0
        %507 = vmatpush1.msra.mxu0 %v480
        %508 = vmatprep.subr.mxu0 0.0
        %509 = vmatpush1.msra.mxu0 %v481
        %510 = vmatprep.subr.mxu0 0.0
        %511 = vmatpush1.msra.mxu0 %v482
        %512 = vmatprep.subr.mxu0 0.0
        %513 = vmatpush1.msra.mxu0 %v483
        %514 = vmatprep.subr.mxu0 0.0
        %515 = vmatpush1.msra.mxu0 0.0
        %516 = vmatprep.subr.mxu0 0.0
        %517 = vmatpush1.msra.mxu0 0.0
        %518 = vmatprep.subr.mxu0 0.0
        %519 = vmatpush1.msra.mxu0 0.0
        %520 = vmatprep.subr.mxu0 0.0
        %521 = vmatpush1.msra.mxu0 0.0
        %522 = vmatprep.subr.mxu0 0.0
        %523 = vmatpush1.msra.mxu0 0.0
        %524 = vmatprep.subr.mxu0 0.0
        %525 = vmatpush1.msra.mxu0 0.0
        %526 = vmatprep.subr.mxu0 0.0
        %527 = vmatpush1.msra.mxu0 0.0
        %528 = vmatprep.subr.mxu0 0.0
        %529 = vmatpush1.msra.mxu0 0.0
        %530 = vmatprep.subr.mxu0 0.0
        %531 = vmatpush1.msra.mxu0 0.0
        %532 = vmatprep.subr.mxu0 0.0
        %533 = vmatpush1.msra.mxu0 0.0
        %534 = vmatprep.subr.mxu0 0.0
        %535 = vmatpush1.msra.mxu0 0.0
        %536 = vmatprep.subr.mxu0 0.0
        %537 = vmatpush1.msra.mxu0 0.0
        %538 = vmatprep.subr.mxu0 0.0
        %539 = vmatpush1.msra.mxu0 0.0
        %540 = vmatprep.subr.mxu0 0.0
        %541 = vmatpush1.msra.mxu0 0.0
        %542 = vmatprep.subr.mxu0 0.0
        %543 = vmatpush1.msra.mxu0 0.0
        %544 = vmatprep.subr.mxu0 0.0
        %545 = vmatpush1.msra.mxu0 0.0
        %546 = vmatprep.subr.mxu0 0.0
        %547 = vmatpush1.msra.mxu0 0.0
        %548 = vmatprep.subr.mxu0 0.0
        %549 = vmatpush1.msra.mxu0 0.0
        %550 = vmatprep.subr.mxu0 0.0
        %551 = vmatpush1.msra.mxu0 0.0
        %552 = vmatprep.subr.mxu0 0.0
        %553 = vmatpush1.msra.mxu0 0.0
        %554 = vmatprep.subr.mxu0 0.0
        %555 = vmatpush1.msra.mxu0 0.0
        %556 = vmatprep.subr.mxu0 0.0
        %557 = vmatpush1.msra.mxu0 0.0
        %558 = vmatprep.subr.mxu0 0.0
        %559 = vmatpush1.msra.mxu0 0.0
        %560 = vmatprep.subr.mxu0 0.0
        %561 = vmatpush1.msra.mxu0 0.0
        %562 = vmatprep.mubr.f32.mxu0 0.0
        %563 = vmatmul.mubr.f32.gmra.mrb[0].mxu0 %v493
        %v564 = vpop.f32.mrb[0].mxu0
        %v565 = vadd.f32 %v489, %v564
        %v566 = vpop.f32.mrb[0].mxu0
        %567 = vmatprep.mubr.f32.mxu0 0.0
        %568 = vmatmul.mubr.f32.gmra.mrb[0].mxu0 %v496
        %v569 = vpop.f32.mrb[0].mxu0
        %v570 = vadd.f32 %v489, %v569
        %v571 = vpop.f32.mrb[0].mxu0
        %572 = vdwg.mxu0
        %573 = vst [vmem:[%s358] sm:$0xff] %v565
        %574 = vst [vmem:[%s358 + $0x8] sm:$0xff] %v570
        %s575 = sand.u32 %s188, 1
        %s576 = scalar_lea.sflag [#allocation5], %s575
        %s577 = sand.u32 %s188, 1
        %s578 = smul.addr %s577, 16
        %s579 = scalar_lea.vmem [#allocation9], %s578
        // Predicated region
        $region57: #{tpu_custom_call.1} parent=39 // pred_check
          %p580 = pneg %p198
        $region58: #{tpu_custom_call.1} parent=39 // pred_check_branch
          %582 = sbr.rel (%p580) target = $region60
        $region59: #{tpu_custom_call.1} parent=39 // pred_region
          %s583 = smul.u32 2, %s29
          %s585 = ssub.s32 256, 256
          %586 = vsyncadd %s576, %s585
          %s587 = sadd.s32 %s30, %s583
          %s588 = smul.addr %s28, 2
          %s589 = sadd.s32 %s587, %s588
          %s590 = smul.addr %s589, 128
          %s591 = scalar_lea.hbm %s5, %s590
          %s592 = sshll.u32 %s579, 4
          %s593 = int_to_ptr.vmem [resolvable:$true] %s592
          %598 = dma.vmem_to_hbm [thread:$0]  %s593, 256, %s591, %s576, 128, 128, 8
        $region60: #{tpu_custom_call.1} parent=39 // pred_fallthru
          _
      $region40: #{tpu_custom_call.1} parent=5 // pred_fallthru
        _
      %p599 = scmp.le.s32.totalorder 2, %s18
      // Predicated region
      $region61: #{tpu_custom_call.1} parent=5 // pred_check
        %p600 = pneg %p599
      $region62: #{tpu_custom_call.1} parent=5 // pred_check_branch
        %602 = sbr.rel (%p600) target = $region64
      $region63: #{tpu_custom_call.1} parent=5 // pred_region
        %s603 = ssub.s32 %s18, 2
        // Predicated region
        $region65: #{tpu_custom_call.1} parent=63 // pred_check
          %p604 = pneg %p204
        $region66: #{tpu_custom_call.1} parent=63 // pred_check_branch
          %606 = sbr.rel (%p604) target = $region68
        $region67: #{tpu_custom_call.1} parent=63 // pred_region
          %s607 = sand.u32 %s189, 1
          %s608 = scalar_lea.sflag [#allocation5], %s607
          %s609 = sand.u32 %s189, 1
          %s610 = smul.addr %s609, 16
          %s611 = scalar_lea.vmem [#allocation9], %s610
          %612 = dma.done %s608, 256
        $region68: #{tpu_custom_call.1} parent=63 // pred_fallthru
          _
      $region64: #{tpu_custom_call.1} parent=5 // pred_fallthru
        _
    $region6: #{tpu_custom_call.1} parent=1 // loop_footer
      %s22 = sadd.s32 1, %s18
    $region7: #{tpu_custom_call.1} parent=1 // loop_footer_branch
      %17 = sbr.rel target = $region3
    $region8: #{tpu_custom_call.1} parent=1 // loop_exit
      _
    %613 = vsyncpa [#allocation4], 1
    %s614 = scalar_lea.sflag [#allocation4], 1
    %615 = vsyncpa %s614, 1
    %616 = vsyncpa [#allocation7], 1
    %s617 = scalar_lea.sflag [#allocation7], 1
    %618 = vsyncpa %s617, 1
    %619 = vsyncpa [#allocation5], 1
    %s620 = scalar_lea.sflag [#allocation5], 1
    %621 = vsyncpa %s620, 1

</llo_original>
